<compile_context>
chip_gen: v7x
topology: tpu7x:2x2x1
jax: 0.10.0
libtpu: 0.0.40
codegen_flags: <defaults>
</compile_context>

<pallas_src>
import functools

import jax
import jax.numpy as jnp
from jax.experimental import pallas as pl
from jax.experimental.pallas import tpu as pltpu

_LANE = 128
_SUBLANE = 8
# Scoped-VMEM limit requested from the compiler (safe on v5e/v6e: 128 MiB
# physical, and on v7x: 64 MiB physical).  Tiles are budgeted well below it.
_VMEM_LIMIT_BYTES = 48 * 1024 * 1024
_TILE_BUDGET_BYTES = 36 * 1024 * 1024


def _round_up(x, m):
    return ((x + m - 1) // m) * m


def _choose_tiles(N, Nc, f_pad, xc_item, out_item, onehot_item, block_rows):
    """Pick (tm, tf) from a VMEM budget instead of a fixed constant."""
    # Feature tile: bound the resident x_coarse slab.  Counted twice because the
    # pipeline double-buffers inputs by default (we bound footprint via
    # F-tiling rather than pl.Buffered(1)).
    tf = f_pad
    while tf > _LANE and 2 * Nc * tf * xc_item > _TILE_BUDGET_BYTES // 4:
        tf -= _LANE
    xc_bytes = 2 * Nc * tf * xc_item
    # Rows per tile from the remaining budget:
    #   double-buffered output tile + in-kernel one-hot temp + idx/val blocks.
    per_row = 2 * tf * out_item + Nc * onehot_item + 16
    avail = max(_TILE_BUDGET_BYTES - xc_bytes, _SUBLANE * per_row)
    tm = (avail // per_row) // _SUBLANE * _SUBLANE
    tm = max(_SUBLANE, min(tm, block_rows, _round_up(N, _SUBLANE)))
    # v7x has two TensorCores fed through the "parallel" row axis: make sure
    # there are at least two row blocks whenever N allows (no-op on v5e/v6e).
    if N >= 2 * _SUBLANE and pl.cdiv(N, tm) < 2:
        tm = _round_up(pl.cdiv(N, 2), _SUBLANE)
    return tm, tf


def _unpool_onehot_kernel(iv_ref, xc_ref, out_ref, *, fold_val):
    """One (tm, tf) output tile via a VPU-built one-hot and a single MXU dot.

    Exact because every output row accumulates exactly one term (P is one-hot),
    so even a bf16 one-hot introduces no rounding beyond the output cast.
    """
    iv = iv_ref[...]                                    # (tm, 2) f32: [idx, val]
    idx = iv[:, 0:1].astype(jnp.int32)                  # (tm, 1)
    val = iv[:, 1:2]                                    # (tm, 1) f32
    xc = xc_ref[...]                                    # (Nc, tf)
    tm, nc = idx.shape[0], xc.shape[0]
    cols = jax.lax.broadcasted_iota(jnp.int32, (tm, nc), dimension=1)
    hit = cols == idx
    if fold_val:
        # f32 features: folding val into the one-hot is exact and removes the
        # (tm, tf) broadcast-multiply from the store path.
        onehot = jnp.where(hit, val, 0.0).astype(xc.dtype)
        out_ref[...] = jnp.dot(
            onehot, xc, preferred_element_type=jnp.float32).astype(out_ref.dtype)
    else:
        onehot = hit.astype(xc.dtype)
        gathered = jnp.dot(onehot, xc, preferred_element_type=jnp.float32)
        out_ref[...] = (gathered * val).astype(out_ref.dtype)


def _unpool_rowgather_kernel(idx_sref, val_ref, xc_ref, out_ref, *, block_rows):
    """One (tm, tf) output tile via direct per-row dynamic VMEM slices.

    O(tm * tf) vld/vst work — no redundant one-hot MXU FLOPs — for large Nc.
    idx_sref lives in SMEM (scalar prefetch) and is padded to the full grid
    extent, so the partial tail tile never produces an OOB VMEM index.
    """
    base = pl.program_id(0) * block_rows

    def body(r, carry):
        src = idx_sref[base + r]                        # scalar from SMEM
        row = xc_ref[pl.ds(src, 1), :]                  # (1, tf)
        w = val_ref[pl.ds(r, 1), :]                     # (1, 1) f32
        out_ref[pl.ds(r, 1), :] = (row * w).astype(out_ref.dtype)
        return carry

    jax.lax.fori_loop(0, block_rows, body, 0)


@functools.partial(jax.jit, static_argnames=("block_rows", "nc_onehot_max"))
def cmg_unpooling(x_coarse, P, *, block_rows=1024, nc_onehot_max=None):
    """x_fine = P @ x_coarse with P: [N, Nc] one-hot rows, x_coarse: [Nc, F].

    Matches the PyTorch module under the documented precondition that every
    row of P has at most one non-zero entry (its sign/scale is honored).
    """
    if isinstance(P, (list, tuple)):
        P = jnp.concatenate(P, axis=0)
    P = jnp.asarray(P)

    N, Nc = P.shape
    Nc2, F = x_coarse.shape
    assert Nc == Nc2, "P and x_coarse disagree on number of coarse nodes"
    out_dtype = x_coarse.dtype

    # One fused XLA pass over P -> per-fine-row (coarse idx, weight).
    idx = jnp.argmax(jnp.abs(P), axis=1).astype(jnp.int32)                 # (N,)
    val = jnp.take_along_axis(P, idx[:, None], axis=1).astype(jnp.float32)  # (N,1)

    # Lane-dense output: pad the feature dim to a multiple of 128 so output
    # tiles lower to unmasked vector stores; slice the result back at the end.
    f_pad = _round_up(F, _LANE)
    xc = x_coarse if f_pad == F else jnp.pad(x_coarse, ((0, 0), (0, f_pad - F)))

    # Path selection: one-hot + MXU dot while the redundant 2*N*Nc*F FLOPs are
    # cheaper than the output write; direct row gather beyond that.  Thresholds
    # are conservative for v5e's weaker MXU; bf16 can afford larger Nc; on v7x
    # (no f32/int MXU fast path) the f32 threshold keeps us off the MXU early.
    if nc_onehot_max is None:
        nc_onehot_max = 1024 if x_coarse.dtype == jnp.bfloat16 else 256
    use_onehot = Nc <= nc_onehot_max

    xc_item = jnp.dtype(x_coarse.dtype).itemsize
    out_item = jnp.dtype(out_dtype).itemsize
    onehot_item = xc_item if use_onehot else 0
    tm, tf = _choose_tiles(N, Nc, f_pad, xc_item, out_item, onehot_item, block_rows)
    row_blocks = pl.cdiv(N, tm)
    f_blocks = pl.cdiv(f_pad, tf)
    grid = (row_blocks, f_blocks)

    compiler_params = pltpu.CompilerParams(
        dimension_semantics=("parallel", "parallel"),
        vmem_limit_bytes=_VMEM_LIMIT_BYTES,
    )
    cost = pl.CostEstimate(
        flops=int(2 * N * Nc * f_pad) if use_onehot else int(2 * N * f_pad),
        transcendentals=0,
        bytes_accessed=int(N * f_pad * out_item + Nc * f_pad * xc_item + 8 * N),
    )

    if use_onehot:
        # Pack (idx, val) into one (N, 2) f32 block: a single small DMA per
        # grid step instead of two lane-width-1 descriptors.  idx is exact as
        # f32 because Nc <= nc_onehot_max << 2**24.
        iv = jnp.concatenate([idx[:, None].astype(jnp.float32), val], axis=1)
        fold_val = jnp.dtype(x_coarse.dtype) == jnp.dtype(jnp.float32)
        out = pl.pallas_call(
            functools.partial(_unpool_onehot_kernel, fold_val=fold_val),
            out_shape=jax.ShapeDtypeStruct((N, f_pad), out_dtype),
            grid=grid,
            in_specs=[
                pl.BlockSpec((tm, 2), lambda i, j: (i, 0)),      # packed idx/val
                pl.BlockSpec((Nc, tf), lambda i, j: (0, j)),     # x_coarse slab
            ],
            out_specs=pl.BlockSpec((tm, tf), lambda i, j: (i, j)),
            compiler_params=compiler_params,
            cost_estimate=cost,
        )(iv, xc)
    else:
        # Row-gather path: idx goes to SMEM via scalar prefetch so each row's
        # coarse index is a real scalar for dynamic VMEM slicing.  Pad it to
        # the full grid extent with 0 so tail rows stay in bounds.
        idx_pad = jnp.pad(idx, (0, row_blocks * tm - N))
        out = pl.pallas_call(
            functools.partial(_unpool_rowgather_kernel, block_rows=tm),
            out_shape=jax.ShapeDtypeStruct((N, f_pad), out_dtype),
            grid_spec=pltpu.PrefetchScalarGridSpec(
                num_scalar_prefetch=1,
                grid=grid,
                in_specs=[
                    pl.BlockSpec((tm, 1), lambda i, j, idx_s: (i, 0)),   # val
                    pl.BlockSpec((Nc, tf), lambda i, j, idx_s: (0, j)),  # x_coarse
                ],
                out_specs=pl.BlockSpec((tm, tf), lambda i, j, idx_s: (i, j)),
            ),
            compiler_params=compiler_params,
            cost_estimate=cost,
        )(idx_pad, val, xc)

    return out if f_pad == F else out[:, :F]


if __name__ == "__main__":
    key = jax.random.PRNGKey(0)
    ks = jax.random.split(key, 9)

    # --- Test 1: one-hot MXU path, F not a multiple of 128 (lane padding),
    #     signed / scaled single-nonzero rows, 2 row blocks. ------------------
    N, Nc, F = 200, 48, 96
    x_coarse = jax.random.normal(ks[0], (Nc, F), dtype=jnp.float32)
    assign = jax.random.randint(ks[1], (N,), 0, Nc)
    w = jax.random.uniform(ks[2], (N,), minval=-2.0, maxval=2.0)
    P = jax.nn.one_hot(assign, Nc, dtype=jnp.float32) * w[:, None]
    out = cmg_unpooling(x_coarse, P)
    jax.block_until_ready(out)
    ref = P @ x_coarse
    assert out.shape == (N, F)
    assert jnp.allclose(out, ref, atol=1e-5, rtol=1e-5)

    # --- Test 2: one-hot MXU path, multi-block grid, partial last row tile. --
    N2, Nc2, F2 = 1000, 64, 128
    x_coarse2 = jax.random.normal(ks[3], (Nc2, F2), dtype=jnp.float32)
    assign2 = jax.random.randint(ks[4], (N2,), 0, Nc2)
    P2 = jax.nn.one_hot(assign2, Nc2, dtype=jnp.float32)
    out2 = cmg_unpooling(x_coarse2, P2)
    jax.block_until_ready(out2)
    ref2 = P2 @ x_coarse2
    assert out2.shape == (N2, F2)
    assert jnp.allclose(out2, ref2, atol=1e-5, rtol=1e-5)

    # --- Test 3: large-Nc row-gather path (no MXU), scaled/negative weights
    #     and a few all-zero rows. --------------------------------------------
    N3, Nc3, F3 = 600, 512, 64
    x_coarse3 = jax.random.normal(ks[5], (Nc3, F3), dtype=jnp.float32)
    assign3 = jax.random.randint(ks[6], (N3,), 0, Nc3)
    w3 = jax.random.uniform(ks[7], (N3,), minval=-1.5, maxval=1.5)
    w3 = jnp.where(jax.random.uniform(ks[8], (N3,)) < 0.05, 0.0, w3)
    P3 = jax.nn.one_hot(assign3, Nc3, dtype=jnp.float32) * w3[:, None]
    out3 = cmg_unpooling(x_coarse3, P3)
    jax.block_until_ready(out3)
    ref3 = P3 @ x_coarse3
    assert out3.shape == (N3, F3)
    assert jnp.allclose(out3, ref3, atol=1e-5, rtol=1e-5)

    print("KERNEL_OK")
</pallas_src>

<mosaic_0001>
module attributes {stable_mosaic.version = 11 : i64} {
  func.func @_unpool_onehot_kernel(%arg0: i32, %arg1: i32, %arg2: memref<104x2xf32, #tpu.memory_space<vmem>>, %arg3: memref<48x128xf32, #tpu.memory_space<vmem>>, %arg4: memref<104x128xf32, #tpu.memory_space<vmem>>) attributes {dimension_semantics = [#tpu.dimension_semantics<parallel>, #tpu.dimension_semantics<parallel>], iteration_bounds = array<i64: 2, 1>, scalar_prefetch = 0 : i64, scratch_operands = 0 : i64, tpu.core_type = #tpu.core_type<tc>, window_params = [{transform_indices = @transform_0, window_bounds = array<i64: 104, 2>}, {transform_indices = @transform_1, window_bounds = array<i64: 48, 128>}, {transform_indices = @transform_2, window_bounds = array<i64: 104, 128>}]} {
    %c0 = arith.constant 0 : index
    %c0_0 = arith.constant 0 : index
    %0 = vector.load %arg2[%c0, %c0_0] : memref<104x2xf32, #tpu.memory_space<vmem>>, vector<104x2xf32>
    %1 = vector.extract_strided_slice %0 {offsets = [0, 0], sizes = [104, 1], strides = [1, 1]} : vector<104x2xf32> to vector<104x1xf32>
    %2 = arith.fptosi %1 : vector<104x1xf32> to vector<104x1xi32>
    %3 = vector.extract_strided_slice %0 {offsets = [0, 1], sizes = [104, 1], strides = [1, 1]} : vector<104x2xf32> to vector<104x1xf32>
    %c0_1 = arith.constant 0 : index
    %c0_2 = arith.constant 0 : index
    %4 = vector.load %arg3[%c0_1, %c0_2] : memref<48x128xf32, #tpu.memory_space<vmem>>, vector<48x128xf32>
    %5 = tpu.iota {dimensions = array<i32: 1>} : vector<104x48xi32>
    %6 = vector.broadcast %2 : vector<104x1xi32> to vector<104x48xi32>
    %7 = arith.cmpi eq, %5, %6 : vector<104x48xi32>
    %cst = arith.constant 0.000000e+00 : f32
    %8 = vector.shape_cast %3 : vector<104x1xf32> to vector<104x1xf32>
    %9 = vector.broadcast %8 : vector<104x1xf32> to vector<104x48xf32>
    %10 = vector.broadcast %cst : f32 to vector<104x48xf32>
    %11 = arith.select %7, %9, %10 : vector<104x48xi1>, vector<104x48xf32>
    %cst_3 = arith.constant dense<0.000000e+00> : vector<104x128xf32>
    %12 = tpu.matmul %11, %4, %cst_3 {dimension_numbers = #tpu.dot_dimension_numbers<[1], [0], [0], [1], [0, 0, 1, 1], [], []>} : vector<104x48xf32>, vector<48x128xf32>, vector<104x128xf32> -> vector<104x128xf32>
    %c0_4 = arith.constant 0 : index
    %c0_5 = arith.constant 0 : index
    %13 = vector.load %arg4[%c0_4, %c0_5] : memref<104x128xf32, #tpu.memory_space<vmem>>, vector<104x128xf32>
    tpu.vector_store %arg4[%c0_4, %c0_5], %12 {strides = array<i32>} : memref<104x128xf32, #tpu.memory_space<vmem>>, vector<104x128xf32>,
    return
  }
  func.func @transform_0(%arg0: i32, %arg1: i32) -> (i32, i32) {
    %c0_i32 = arith.constant 0 : i32
    %c0_i32_0 = arith.constant 0 : i32
    return %arg0, %c0_i32 : i32, i32
  }
  func.func @transform_1(%arg0: i32, %arg1: i32) -> (i32, i32) {
    %c0_i32 = arith.constant 0 : i32
    %c0_i32_0 = arith.constant 0 : i32
    return %c0_i32, %arg1 : i32, i32
  }
  func.func @transform_2(%arg0: i32, %arg1: i32) -> (i32, i32) {
    %c0_i32 = arith.constant 0 : i32
    return %arg0, %arg1 : i32, i32
  }
}

</mosaic_0001>

<llo_original>
// kernel: cmg_unpooling.1
$region0: #{cmg_unpooling.1}
  #allocation0 [shape = 'u32[]', space=smem, size = 0x4, offset = 0x4, fixed_abs, tag = 'smem constant byte address 0x4 - core index']
  #allocation1 [shape = 'u32[144,128]{1,0:T(1,128)}', space=vmem, size = 0x12000, scoped, tag = 'internal scratch']
  %s0 = inlined_call_operand.vmem [shape: f32[200,2], index: 0, kind: input, shape index: {}]
  %s1 = inlined_call_operand.vmem [shape: f32[48,128], index: 1, kind: input, shape index: {}]
  %s2 = inlined_call_operand.vmem [shape: f32[200,128], index: 2, kind: output, shape index: {}]
  %s3 = sld [smem:[#allocation0]]
  $region89: #{cmg_unpooling.1} parent=0
    _
  %s5 = ssub.s32 1, %s3
  %s6 = scalar_select 0, %s5, %s3
  $region1: #{cmg_unpooling.1} parent=0
    #allocation2 [shape = 'u8[106496]{0}', space=vmem, size = 0x1a000, scoped, tag = 'output window, operand 0']
    loop: start=0, step=1, limit=4
    $region2: #{cmg_unpooling.1} parent=1 // loop_pre_header
      _
    $region3: #{cmg_unpooling.1} parent=1 // loop_header
      %s8 = sphi 0, %s12
      %p9 = scmp.ge.s32.totalorder %s8, 4
      %s15 = sphi 0, %s27
      %s16 = sphi 0, %s23
      %s17 = sphi 0, %s15
      %s18 = sphi 0, %s16
      %s19 = sphi 0, %s17
      %s20 = sphi 0, %s18
      %s30 = sphi 0, %s32
      %s33 = sphi 0, %s30
      %s34 = sphi 0, %s33
      %s50 = sphi 0, %s34
      %s56 = sphi 0, %s58
      %s59 = sphi 0, %s56
      %s60 = sphi 0, %s59
      %s76 = sphi 0, %s60
      %s84 = sphi 0, %s86
      %s87 = sphi 0, %s84
      %s88 = sphi 0, %s87
      %s104 = sphi 0, %s88
    $region4: #{cmg_unpooling.1} parent=1 // loop_header_branch
      %11 = sbr.rel (%p9) target = $region8
    $region5: #{cmg_unpooling.1} parent=1 // loop_body
      %s13 = ssub.s32 %s8, 1
      %s14 = ssub.s32 %s8, 2
      %s21 = sadd.s32 1, %s16
      %p22 = scmp.ge.s32.totalorder %s21, 1
      %s23 = scalar_select %p22, 0, %s21
      %s24 = sadd.s32 1, %s15
      %s25 = scalar_select %p22, %s24, %s15
      %p26 = scmp.ge.s32.totalorder %s25, 2
      %s27 = scalar_select %p26, 0, %s25
      %s28 = ssub.s32 %s15, %s27
      %p29 = scmp.eq.s32.totalorder %s28, 0
      %s31 = sadd.s32 %s30, 1
      %s32 = scalar_select %p29, %s30, %s31
      %p35 = pneg %p29
      %p36 = scmp.eq.s32.totalorder %s8, 1
      %p37 = por %p35, %p36
      %p38 = scmp.ne.s32.totalorder %s30, %s33
      %p39 = scmp.eq.s32.totalorder %s8, 0
      %p40 = por %p38, %p39
      %p41 = scmp.ne.s32.totalorder %s30, %s33
      %p42 = scmp.eq.s32.totalorder %s13, 1
      %p43 = por %p41, %p42
      %p44 = scmp.ne.s32.totalorder %s33, %s34
      %p45 = scmp.eq.s32.totalorder %s13, 0
      %p46 = por %p44, %p45
      %p47 = scmp.ne.s32.totalorder %s33, %s34
      %p48 = scmp.eq.s32.totalorder %s14, 1
      %p49 = por %p47, %p48
      %p51 = scmp.ne.s32.totalorder %s34, %s50
      %p52 = scmp.eq.s32.totalorder %s14, 0
      %p53 = por %p51, %p52
      %s54 = ssub.s32 %s16, %s23
      %p55 = scmp.eq.s32.totalorder %s54, 0
      %s57 = sadd.s32 %s56, 1
      %s58 = scalar_select %p55, %s56, %s57
      %p61 = pneg %p55
      %p62 = scmp.eq.s32.totalorder %s8, 1
      %p63 = por %p61, %p62
      %p64 = scmp.ne.s32.totalorder %s56, %s59
      %p65 = scmp.eq.s32.totalorder %s8, 0
      %p66 = por %p64, %p65
      %p67 = scmp.ne.s32.totalorder %s56, %s59
      %p68 = scmp.eq.s32.totalorder %s13, 1
      %p69 = por %p67, %p68
      %p70 = scmp.ne.s32.totalorder %s59, %s60
      %p71 = scmp.eq.s32.totalorder %s13, 0
      %p72 = por %p70, %p71
      %p73 = scmp.ne.s32.totalorder %s59, %s60
      %p74 = scmp.eq.s32.totalorder %s14, 1
      %p75 = por %p73, %p74
      %p77 = scmp.ne.s32.totalorder %s60, %s76
      %p78 = scmp.eq.s32.totalorder %s14, 0
      %p79 = por %p77, %p78
      %s80 = ssub.s32 %s15, %s27
      %s81 = ssub.s32 %s16, %s23
      %s82 = sor.u32 %s80, %s81
      %p83 = scmp.eq.s32.totalorder %s82, 0
      %s85 = sadd.s32 %s84, 1
      %s86 = scalar_select %p83, %s84, %s85
      %p89 = pneg %p83
      %p90 = scmp.eq.s32.totalorder %s8, 1
      %p91 = por %p89, %p90
      %p92 = scmp.ne.s32.totalorder %s84, %s87
      %p93 = scmp.eq.s32.totalorder %s8, 0
      %p94 = por %p92, %p93
      %p95 = scmp.ne.s32.totalorder %s84, %s87
      %p96 = scmp.eq.s32.totalorder %s13, 1
      %p97 = por %p95, %p96
      %p98 = scmp.ne.s32.totalorder %s87, %s88
      %p99 = scmp.eq.s32.totalorder %s13, 0
      %p100 = por %p98, %p99
      %p101 = scmp.ne.s32.totalorder %s87, %s88
      %p102 = scmp.eq.s32.totalorder %s14, 1
      %p103 = por %p101, %p102
      %p105 = scmp.ne.s32.totalorder %s88, %s104
      %p106 = scmp.eq.s32.totalorder %s14, 0
      %p107 = por %p105, %p106
      %p108 = scmp.le.s32.totalorder 1, %s8
      %p109 = scmp.lt.s32.totalorder %s8, 3
      %p110 = pnand %p108, %p109
      %p111 = pneg %p110
      // Predicated region
      $region9: #{cmg_unpooling.1} parent=5 // pred_check
        _
      $region10: #{cmg_unpooling.1} parent=5 // pred_check_branch
        %113 = sbr.rel (%p110) target = $region12
      $region11: #{cmg_unpooling.1} parent=5 // pred_region
        %s114 = ssub.s32 %s8, 1
        // Predicated region
        $region13: #{cmg_unpooling.1} parent=11 // pred_check
          %p115 = pneg %p72
        $region14: #{cmg_unpooling.1} parent=11 // pred_check_branch
          %117 = sbr.rel (%p115) target = $region16
        $region15: #{cmg_unpooling.1} parent=11 // pred_region
          %p118 = scmp.lt.s32.totalorder %s18, 0
          %s119 = scalar_select %p118, %s18, 0
          %s120 = smul.addr %s119, 8
          %s121 = scalar_lea.vmem %s1, %s120
        $region16: #{cmg_unpooling.1} parent=11 // pred_fallthru
          _
      $region12: #{cmg_unpooling.1} parent=5 // pred_fallthru
        _
      %p122 = scmp.lt.s32.totalorder %s8, 2
      // Predicated region
      $region17: #{cmg_unpooling.1} parent=5 // pred_check
        %p123 = pneg %p122
      $region18: #{cmg_unpooling.1} parent=5 // pred_check_branch
        %125 = sbr.rel (%p123) target = $region20
      $region19: #{cmg_unpooling.1} parent=5 // pred_region
        // Predicated region
        $region21: #{cmg_unpooling.1} parent=19 // pred_check
          %p126 = pneg %p40
        $region22: #{cmg_unpooling.1} parent=19 // pred_check_branch
          %128 = sbr.rel (%p126) target = $region24
        $region23: #{cmg_unpooling.1} parent=19 // pred_region
          %s129 = smul.u32 13, %s15
          %s130 = ssub.s32 25, %s129
          %p131 = scmp.lt.s32.totalorder %s130, 13
          %s132 = scalar_select %p131, %s130, 13
          %s133 = smul.u32 128, %s132
          %p134 = scmp.lt.s32.totalorder %s129, 24
          %s135 = scalar_select %p134, %s129, 24
          %s136 = smul.addr %s135, 8
          %s137 = scalar_lea.vmem %s0, %s136
          %s138 = smul.u32 13, %s15
          %s139 = ssub.s32 25, %s138
          %p140 = scmp.lt.s32.totalorder %s139, 13
          %s141 = scalar_select %p140, %s139, 13
          %s142 = smul.u32 128, %s141
        $region24: #{cmg_unpooling.1} parent=19 // pred_fallthru
          _
      $region20: #{cmg_unpooling.1} parent=5 // pred_fallthru
        _
      %p143 = scmp.le.s32.totalorder 1, %s8
      %p144 = scmp.lt.s32.totalorder %s8, 3
      %p145 = pnand %p143, %p144
      %p146 = pneg %p145
      // Predicated region
      $region25: #{cmg_unpooling.1} parent=5 // pred_check
        _
      $region26: #{cmg_unpooling.1} parent=5 // pred_check_branch
        %148 = sbr.rel (%p145) target = $region28
      $region27: #{cmg_unpooling.1} parent=5 // pred_region
        %s149 = ssub.s32 %s8, 1
        %s150 = smul.u32 13, %s17
        %s151 = ssub.s32 25, %s150
        %p152 = scmp.lt.s32.totalorder %s151, 13
        %s153 = scalar_select %p152, %s151, 13
        %s154 = smul.u32 128, %s153
        %p155 = scmp.lt.s32.totalorder %s150, 24
        %s156 = scalar_select %p155, %s150, 24
        %s157 = smul.addr %s156, 8
        %s158 = scalar_lea.vmem %s0, %s157
        %p159 = pneg %p46
        %p160 = pneg %p43
        %p161 = scmp.lt.s32.totalorder %s18, 0
        %s162 = scalar_select %p161, %s18, 0
        %s163 = smul.addr %s162, 8
        %s164 = scalar_lea.vmem %s1, %s163
        %p165 = pneg %p72
        %p166 = pneg %p69
        %p167 = pneg %p100
        %p168 = pneg %p97
        %s169 = sand.u32 %s87, 1
        %s170 = sand.u32 %s87, 1
        %s171 = smul.addr %s170, 104
        %s172 = scalar_lea.vmem [#allocation2], %s171
        %s173 = smul.u32 13, %s17
        %s174 = ssub.s32 25, %s173
        %p175 = scmp.lt.s32.totalorder %s174, 13
        %s176 = scalar_select %p175, %s174, 13
        %s177 = smul.u32 128, %s176
        %p178 = scmp.lt.s32.totalorder %s173, 24
        %s179 = scalar_select %p178, %s173, 24
        %s180 = smul.addr %s179, 8
        %s181 = scalar_lea.vmem %s0, %s180
        %s182 = smul.u32 13, %s17
        %s183 = ssub.s32 25, %s182
        %p184 = scmp.lt.s32.totalorder %s183, 13
        %s185 = scalar_select %p184, %s183, 13
        %s186 = smul.u32 128, %s185
        %p187 = scmp.lt.s32.totalorder %s18, 0
        %s188 = scalar_select %p187, %s18, 0
        %s189 = smul.addr %s188, 8
        %s190 = scalar_lea.vmem %s1, %s189
        %s191 = smul.u32 13, %s17
        %s192 = ssub.s32 25, %s191
        %p193 = scmp.lt.s32.totalorder %s192, 13
        %s194 = scalar_select %p193, %s192, 13
        %s195 = smul.u32 128, %s194
        %v196 = vld [vmem:[%s181] sm:$0xff]
        %v197 = vld [vmem:[%s181 + $0x8] sm:$0xff]
        %v198 = vld [vmem:[%s181 + $0x10] sm:$0xff]
        %v199 = vld [vmem:[%s181 + $0x18] sm:$0xff]
        %v200 = vld [vmem:[%s181 + $0x20] sm:$0xff]
        %v201 = vld [vmem:[%s181 + $0x28] sm:$0xff]
        %v202 = vld [vmem:[%s181 + $0x30] sm:$0xff]
        %v203 = vld [vmem:[%s181 + $0x38] sm:$0xff]
        %v204 = vld [vmem:[%s181 + $0x40] sm:$0xff]
        %v205 = vld [vmem:[%s181 + $0x48] sm:$0xff]
        %v206 = vld [vmem:[%s181 + $0x50] sm:$0xff]
        %v207 = vld [vmem:[%s181 + $0x58] sm:$0xff]
        %v208 = vld [vmem:[%s181 + $0x60] sm:$0xff]
        %v209 = vcvt.f32.s32.to.zero.pseudo %v196
        %v210 = vcvt.f32.s32.to.zero.pseudo %v197
        %v211 = vcvt.f32.s32.to.zero.pseudo %v198
        %v212 = vcvt.f32.s32.to.zero.pseudo %v199
        %v213 = vcvt.f32.s32.to.zero.pseudo %v200
        %v214 = vcvt.f32.s32.to.zero.pseudo %v201
        %v215 = vcvt.f32.s32.to.zero.pseudo %v202
        %v216 = vcvt.f32.s32.to.zero.pseudo %v203
        %v217 = vcvt.f32.s32.to.zero.pseudo %v204
        %v218 = vcvt.f32.s32.to.zero.pseudo %v205
        %v219 = vcvt.f32.s32.to.zero.pseudo %v206
        %v220 = vcvt.f32.s32.to.zero.pseudo %v207
        %v221 = vcvt.f32.s32.to.zero.pseudo %v208
        %v222 = vld [vmem:[%s190] sm:$0xff]
        %v223 = vld [vmem:[%s190 + $0x8] sm:$0xff]
        %v224 = vld [vmem:[%s190 + $0x10] sm:$0xff]
        %v225 = vld [vmem:[%s190 + $0x18] sm:$0xff]
        %v226 = vld [vmem:[%s190 + $0x20] sm:$0xff]
        %v227 = vld [vmem:[%s190 + $0x28] sm:$0xff]
        %v228 = vlaneseq
        %v229 = vand.u32 %v228, 127
        %230 = vset.pattern.permute.xlu0 0
        %231 = vperm.xlu0 %230, %v209
        %v232 = vpop.permute.xlu0 %231
        %233 = vset.pattern.permute.xlu0 0
        %234 = vperm.xlu0 %233, %v210
        %v235 = vpop.permute.xlu0 %234
        %236 = vset.pattern.permute.xlu0 0
        %237 = vperm.xlu0 %236, %v211
        %v238 = vpop.permute.xlu0 %237
        %239 = vset.pattern.permute.xlu0 0
        %240 = vperm.xlu0 %239, %v212
        %v241 = vpop.permute.xlu0 %240
        %242 = vset.pattern.permute.xlu0 0
        %243 = vperm.xlu0 %242, %v213
        %v244 = vpop.permute.xlu0 %243
        %245 = vset.pattern.permute.xlu0 0
        %246 = vperm.xlu0 %245, %v214
        %v247 = vpop.permute.xlu0 %246
        %248 = vset.pattern.permute.xlu0 0
        %249 = vperm.xlu0 %248, %v215
        %v250 = vpop.permute.xlu0 %249
        %251 = vset.pattern.permute.xlu0 0
        %252 = vperm.xlu0 %251, %v216
        %v253 = vpop.permute.xlu0 %252
        %254 = vset.pattern.permute.xlu0 0
        %255 = vperm.xlu0 %254, %v217
        %v256 = vpop.permute.xlu0 %255
        %257 = vset.pattern.permute.xlu0 0
        %258 = vperm.xlu0 %257, %v218
        %v259 = vpop.permute.xlu0 %258
        %260 = vset.pattern.permute.xlu0 0
        %261 = vperm.xlu0 %260, %v219
        %v262 = vpop.permute.xlu0 %261
        %263 = vset.pattern.permute.xlu0 0
        %264 = vperm.xlu0 %263, %v220
        %v265 = vpop.permute.xlu0 %264
        %266 = vset.pattern.permute.xlu0 0
        %267 = vperm.xlu0 %266, %v221
        %v268 = vpop.permute.xlu0 %267
        %vm269 = vcmp.eq.s32.totalorder %v229, %v232
        %vm270 = vcmp.eq.s32.totalorder %v229, %v235
        %vm271 = vcmp.eq.s32.totalorder %v229, %v238
        %vm272 = vcmp.eq.s32.totalorder %v229, %v241
        %vm273 = vcmp.eq.s32.totalorder %v229, %v244
        %vm274 = vcmp.eq.s32.totalorder %v229, %v247
        %vm275 = vcmp.eq.s32.totalorder %v229, %v250
        %vm276 = vcmp.eq.s32.totalorder %v229, %v253
        %vm277 = vcmp.eq.s32.totalorder %v229, %v256
        %vm278 = vcmp.eq.s32.totalorder %v229, %v259
        %vm279 = vcmp.eq.s32.totalorder %v229, %v262
        %vm280 = vcmp.eq.s32.totalorder %v229, %v265
        %vm281 = vcmp.eq.s32.totalorder %v229, %v268
        %283 = vset.pattern.permute.xlu0 1
        %284 = vperm.xlu0 %283, %v196
        %v285 = vpop.permute.xlu0 %284
        %288 = vset.pattern.permute.xlu0 1
        %289 = vperm.xlu0 %288, %v197
        %v290 = vpop.permute.xlu0 %289
        %293 = vset.pattern.permute.xlu0 1
        %294 = vperm.xlu0 %293, %v198
        %v295 = vpop.permute.xlu0 %294
        %298 = vset.pattern.permute.xlu0 1
        %299 = vperm.xlu0 %298, %v199
        %v300 = vpop.permute.xlu0 %299
        %303 = vset.pattern.permute.xlu0 1
        %304 = vperm.xlu0 %303, %v200
        %v305 = vpop.permute.xlu0 %304
        %308 = vset.pattern.permute.xlu0 1
        %309 = vperm.xlu0 %308, %v201
        %v310 = vpop.permute.xlu0 %309
        %313 = vset.pattern.permute.xlu0 1
        %314 = vperm.xlu0 %313, %v202
        %v315 = vpop.permute.xlu0 %314
        %318 = vset.pattern.permute.xlu0 1
        %319 = vperm.xlu0 %318, %v203
        %v320 = vpop.permute.xlu0 %319
        %323 = vset.pattern.permute.xlu0 1
        %324 = vperm.xlu0 %323, %v204
        %v325 = vpop.permute.xlu0 %324
        %328 = vset.pattern.permute.xlu0 1
        %329 = vperm.xlu0 %328, %v205
        %v330 = vpop.permute.xlu0 %329
        %333 = vset.pattern.permute.xlu0 1
        %334 = vperm.xlu0 %333, %v206
        %v335 = vpop.permute.xlu0 %334
        %338 = vset.pattern.permute.xlu0 1
        %339 = vperm.xlu0 %338, %v207
        %v340 = vpop.permute.xlu0 %339
        %343 = vset.pattern.permute.xlu0 1
        %344 = vperm.xlu0 %343, %v208
        %v345 = vpop.permute.xlu0 %344
        %v347 = vsel %vm269, %v285, 0.0
        %v348 = vsel %vm270, %v290, 0.0
        %v349 = vsel %vm271, %v295, 0.0
        %v350 = vsel %vm272, %v300, 0.0
        %v351 = vsel %vm273, %v305, 0.0
        %v352 = vsel %vm274, %v310, 0.0
        %v353 = vsel %vm275, %v315, 0.0
        %v354 = vsel %vm276, %v320, 0.0
        %v355 = vsel %vm277, %v325, 0.0
        %v356 = vsel %vm278, %v330, 0.0
        %v357 = vsel %vm279, %v335, 0.0
        %v358 = vsel %vm280, %v340, 0.0
        %v359 = vsel %vm281, %v345, 0.0
        %vm360 = vcmask 392192
        %v362 = vsel %vm360, %v347, 0
        %v365 = vsel %vm360, %v348, 0
        %v368 = vsel %vm360, %v349, 0
        %v371 = vsel %vm360, %v350, 0
        %v374 = vsel %vm360, %v351, 0
        %v377 = vsel %vm360, %v352, 0
        %v380 = vsel %vm360, %v353, 0
        %v383 = vsel %vm360, %v354, 0
        %v386 = vsel %vm360, %v355, 0
        %v389 = vsel %vm360, %v356, 0
        %v392 = vsel %vm360, %v357, 0
        %v395 = vsel %vm360, %v358, 0
        %v398 = vsel %vm360, %v359, 0
        %400 = vmatprep.subr.mxu0 0.0
        %401 = vmatpush1.msra.mxu0 %v222
        %402 = vmatprep.subr.mxu0 0.0
        %403 = vmatpush1.msra.mxu0 %v223
        %404 = vmatprep.subr.mxu0 0.0
        %405 = vmatpush1.msra.mxu0 %v224
        %406 = vmatprep.subr.mxu0 0.0
        %407 = vmatpush1.msra.mxu0 %v225
        %408 = vmatprep.subr.mxu0 0.0
        %409 = vmatpush1.msra.mxu0 %v226
        %410 = vmatprep.subr.mxu0 0.0
        %411 = vmatpush1.msra.mxu0 %v227
        %412 = vmatprep.subr.mxu0 0.0
        %413 = vmatpush1.msra.mxu0 0.0
        %414 = vmatprep.subr.mxu0 0.0
        %415 = vmatpush1.msra.mxu0 0.0
        %416 = vmatprep.subr.mxu0 0.0
        %417 = vmatpush1.msra.mxu0 0.0
        %418 = vmatprep.subr.mxu0 0.0
        %419 = vmatpush1.msra.mxu0 0.0
        %420 = vmatprep.subr.mxu0 0.0
        %421 = vmatpush1.msra.mxu0 0.0
        %422 = vmatprep.subr.mxu0 0.0
        %423 = vmatpush1.msra.mxu0 0.0
        %424 = vmatprep.subr.mxu0 0.0
        %425 = vmatpush1.msra.mxu0 0.0
        %426 = vmatprep.subr.mxu0 0.0
        %427 = vmatpush1.msra.mxu0 0.0
        %428 = vmatprep.subr.mxu0 0.0
        %429 = vmatpush1.msra.mxu0 0.0
        %430 = vmatprep.subr.mxu0 0.0
        %431 = vmatpush1.msra.mxu0 0.0
        %432 = vmatprep.subr.mxu0 0.0
        %433 = vmatpush1.msra.mxu0 0.0
        %434 = vmatprep.subr.mxu0 0.0
        %435 = vmatpush1.msra.mxu0 0.0
        %436 = vmatprep.subr.mxu0 0.0
        %437 = vmatpush1.msra.mxu0 0.0
        %438 = vmatprep.subr.mxu0 0.0
        %439 = vmatpush1.msra.mxu0 0.0
        %440 = vmatprep.subr.mxu0 0.0
        %441 = vmatpush1.msra.mxu0 0.0
        %442 = vmatprep.subr.mxu0 0.0
        %443 = vmatpush1.msra.mxu0 0.0
        %444 = vmatprep.subr.mxu0 0.0
        %445 = vmatpush1.msra.mxu0 0.0
        %446 = vmatprep.subr.mxu0 0.0
        %447 = vmatpush1.msra.mxu0 0.0
        %448 = vmatprep.subr.mxu0 0.0
        %449 = vmatpush1.msra.mxu0 0.0
        %450 = vmatprep.subr.mxu0 0.0
        %451 = vmatpush1.msra.mxu0 0.0
        %452 = vmatprep.subr.mxu0 0.0
        %453 = vmatpush1.msra.mxu0 0.0
        %454 = vmatprep.subr.mxu0 0.0
        %455 = vmatpush1.msra.mxu0 0.0
        %456 = vmatprep.subr.mxu0 0.0
        %457 = vmatpush1.msra.mxu0 0.0
        %458 = vmatprep.subr.mxu0 0.0
        %459 = vmatpush1.msra.mxu0 0.0
        %460 = vmatprep.subr.mxu0 0.0
        %461 = vmatpush1.msra.mxu0 0.0
        %462 = vmatprep.subr.mxu0 0.0
        %463 = vmatpush1.msra.mxu0 0.0
        %464 = vmatprep.mubr.f32.mxu0 0.0
        %465 = vmatmul.mubr.f32.gmra.mrb[0].mxu0 %v362
        %v466 = vpop.f32.mrb[0].mxu0
        %v467 = vadd.f32 0.0, %v466
        %v468 = vpop.f32.mrb[0].mxu0
        %469 = vmatprep.mubr.f32.mxu0 0.0
        %470 = vmatmul.mubr.f32.gmra.mrb[0].mxu0 %v365
        %v471 = vpop.f32.mrb[0].mxu0
        %v472 = vadd.f32 0.0, %v471
        %v473 = vpop.f32.mrb[0].mxu0
        %474 = vmatprep.mubr.f32.mxu0 0.0
        %475 = vmatmul.mubr.f32.gmra.mrb[0].mxu0 %v368
        %v476 = vpop.f32.mrb[0].mxu0
        %v477 = vadd.f32 0.0, %v476
        %v478 = vpop.f32.mrb[0].mxu0
        %479 = vmatprep.mubr.f32.mxu0 0.0
        %480 = vmatmul.mubr.f32.gmra.mrb[0].mxu0 %v371
        %v481 = vpop.f32.mrb[0].mxu0
        %v482 = vadd.f32 0.0, %v481
        %v483 = vpop.f32.mrb[0].mxu0
        %484 = vmatprep.mubr.f32.mxu0 0.0
        %485 = vmatmul.mubr.f32.gmra.mrb[0].mxu0 %v374
        %v486 = vpop.f32.mrb[0].mxu0
        %v487 = vadd.f32 0.0, %v486
        %v488 = vpop.f32.mrb[0].mxu0
        %489 = vmatprep.mubr.f32.mxu0 0.0
        %490 = vmatmul.mubr.f32.gmra.mrb[0].mxu0 %v377
        %v491 = vpop.f32.mrb[0].mxu0
        %v492 = vadd.f32 0.0, %v491
        %v493 = vpop.f32.mrb[0].mxu0
        %494 = vmatprep.mubr.f32.mxu0 0.0
        %495 = vmatmul.mubr.f32.gmra.mrb[0].mxu0 %v380
        %v496 = vpop.f32.mrb[0].mxu0
        %v497 = vadd.f32 0.0, %v496
        %v498 = vpop.f32.mrb[0].mxu0
        %499 = vmatprep.mubr.f32.mxu0 0.0
        %500 = vmatmul.mubr.f32.gmra.mrb[0].mxu0 %v383
        %v501 = vpop.f32.mrb[0].mxu0
        %v502 = vadd.f32 0.0, %v501
        %v503 = vpop.f32.mrb[0].mxu0
        %504 = vmatprep.mubr.f32.mxu0 0.0
        %505 = vmatmul.mubr.f32.gmra.mrb[0].mxu0 %v386
        %v506 = vpop.f32.mrb[0].mxu0
        %v507 = vadd.f32 0.0, %v506
        %v508 = vpop.f32.mrb[0].mxu0
        %509 = vmatprep.mubr.f32.mxu0 0.0
        %510 = vmatmul.mubr.f32.gmra.mrb[0].mxu0 %v389
        %v511 = vpop.f32.mrb[0].mxu0
        %v512 = vadd.f32 0.0, %v511
        %v513 = vpop.f32.mrb[0].mxu0
        %514 = vmatprep.mubr.f32.mxu0 0.0
        %515 = vmatmul.mubr.f32.gmra.mrb[0].mxu0 %v392
        %v516 = vpop.f32.mrb[0].mxu0
        %v517 = vadd.f32 0.0, %v516
        %v518 = vpop.f32.mrb[0].mxu0
        %519 = vmatprep.mubr.f32.mxu0 0.0
        %520 = vmatmul.mubr.f32.gmra.mrb[0].mxu0 %v395
        %v521 = vpop.f32.mrb[0].mxu0
        %v522 = vadd.f32 0.0, %v521
        %v523 = vpop.f32.mrb[0].mxu0
        %524 = vmatprep.mubr.f32.mxu0 0.0
        %525 = vmatmul.mubr.f32.gmra.mrb[0].mxu0 %v398
        %v526 = vpop.f32.mrb[0].mxu0
        %v527 = vadd.f32 0.0, %v526
        %v528 = vpop.f32.mrb[0].mxu0
        %529 = vdwg.mxu0
        %530 = vst [vmem:[%s172] sm:$0xff] %v467
        %531 = vst [vmem:[%s172 + $0x8] sm:$0xff] %v472
        %532 = vst [vmem:[%s172 + $0x10] sm:$0xff] %v477
        %533 = vst [vmem:[%s172 + $0x18] sm:$0xff] %v482
        %534 = vst [vmem:[%s172 + $0x20] sm:$0xff] %v487
        %535 = vst [vmem:[%s172 + $0x28] sm:$0xff] %v492
        %536 = vst [vmem:[%s172 + $0x30] sm:$0xff] %v497
        %537 = vst [vmem:[%s172 + $0x38] sm:$0xff] %v502
        %538 = vst [vmem:[%s172 + $0x40] sm:$0xff] %v507
        %539 = vst [vmem:[%s172 + $0x48] sm:$0xff] %v512
        %540 = vst [vmem:[%s172 + $0x50] sm:$0xff] %v517
        %541 = vst [vmem:[%s172 + $0x58] sm:$0xff] %v522
        %542 = vst [vmem:[%s172 + $0x60] sm:$0xff] %v527
        %s543 = sand.u32 %s87, 1
        %s544 = sand.u32 %s87, 1
        %s545 = smul.addr %s544, 104
        %s546 = scalar_lea.vmem [#allocation2], %s545
        // Predicated region
        $region29: #{cmg_unpooling.1} parent=27 // pred_check
          %p547 = pneg %p97
        $region30: #{cmg_unpooling.1} parent=27 // pred_check_branch
          %549 = sbr.rel (%p547) target = $region32
        $region31: #{cmg_unpooling.1} parent=27 // pred_region
          %s550 = smul.u32 13, %s17
          %s551 = ssub.s32 25, %s550
          %p552 = scmp.lt.s32.totalorder %s551, 13
          %s553 = scalar_select %p552, %s551, 13
          %s554 = smul.u32 128, %s553
          %p555 = scmp.ne.s32.totalorder 0, %s554
          %s556 = sadd.s32 %s18, %s550
          %s557 = smul.addr %s556, 8
          %s558 = scalar_lea.vmem %s2, %s557
          // Predicated region
          $region33: #{cmg_unpooling.1} parent=31 // pred_check
            %p559 = pneg %p555
          $region34: #{cmg_unpooling.1} parent=31 // pred_check_branch
            %561 = sbr.rel (%p559) target = $region36
          $region35: #{cmg_unpooling.1} parent=31 // pred_region
            // Predicated region
            $region37: #{cmg_unpooling.1} parent=35 // pred_check
              _
            $region38: #{cmg_unpooling.1} parent=35 // pred_check_branch
              %563 = sbr.rel (0) target = $region40
            $region39: #{cmg_unpooling.1} parent=35 // pred_region
              // Predicated region
              $region59: #{cmg_unpooling.1} parent=39 // pred_check
                _
              $region60: #{cmg_unpooling.1} parent=39 // pred_check_branch
                %637 = sbr.rel (0) target = $region62
              $region61: #{cmg_unpooling.1} parent=39 // pred_region
                %s638 = sdiv.u32.pop %s553, 13
                %s639 = srem.u32.pop %s553, 13
                // While loop
                $region63: #{cmg_unpooling.1} parent=61 // loop_pre_header
                  _
                $region64: #{cmg_unpooling.1} parent=61 // loop_header
                  %s641 = sphi 0, %s643
                  %p642 = scmp.ge.s32.totalorder %s641, %s638
                  %s646 = sphi 0, %s677
                  %s647 = sphi %s546, %s680
                  %s648 = sphi %s558, %s681
                $region65: #{cmg_unpooling.1} parent=61 // loop_header_branch
                  %645 = sbr.rel (%p642) target = $region69
                $region66: #{cmg_unpooling.1} parent=61 // loop_body
                  %v649 = vld [vmem:[%s647] sm:$0xff]
                  %650 = vst [vmem:[%s648] sm:$0xff] %v649
                  %v651 = vld [vmem:[%s647 + $0x8] sm:$0xff]
                  %652 = vst [vmem:[%s648 + $0x8] sm:$0xff] %v651
                  %v653 = vld [vmem:[%s647 + $0x10] sm:$0xff]
                  %654 = vst [vmem:[%s648 + $0x10] sm:$0xff] %v653
                  %v655 = vld [vmem:[%s647 + $0x18] sm:$0xff]
                  %656 = vst [vmem:[%s648 + $0x18] sm:$0xff] %v655
                  %v657 = vld [vmem:[%s647 + $0x20] sm:$0xff]
                  %658 = vst [vmem:[%s648 + $0x20] sm:$0xff] %v657
                  %v659 = vld [vmem:[%s647 + $0x28] sm:$0xff]
                  %660 = vst [vmem:[%s648 + $0x28] sm:$0xff] %v659
                  %v661 = vld [vmem:[%s647 + $0x30] sm:$0xff]
                  %662 = vst [vmem:[%s648 + $0x30] sm:$0xff] %v661
                  %v663 = vld [vmem:[%s647 + $0x38] sm:$0xff]
                  %664 = vst [vmem:[%s648 + $0x38] sm:$0xff] %v663
                  %v665 = vld [vmem:[%s647 + $0x40] sm:$0xff]
                  %666 = vst [vmem:[%s648 + $0x40] sm:$0xff] %v665
                  %v667 = vld [vmem:[%s647 + $0x48] sm:$0xff]
                  %668 = vst [vmem:[%s648 + $0x48] sm:$0xff] %v667
                  %v669 = vld [vmem:[%s647 + $0x50] sm:$0xff]
                  %670 = vst [vmem:[%s648 + $0x50] sm:$0xff] %v669
                  %v671 = vld [vmem:[%s647 + $0x58] sm:$0xff]
                  %672 = vst [vmem:[%s648 + $0x58] sm:$0xff] %v671
                  %v673 = vld [vmem:[%s647 + $0x60] sm:$0xff]
                  %674 = vst [vmem:[%s648 + $0x60] sm:$0xff] %v673
                  %s675 = sadd.s32 1, %s646
                  %p676 = scmp.ge.s32.totalorder %s675, %s638
                  %s677 = scalar_select %p676, 0, %s675
                  %s678 = smul.u32 %s677, 104
                  %s679 = smul.u32 %s677, 104
                  %s680 = scalar_lea.vmem %s546, %s678 [#allocation2]
                  %s681 = scalar_lea.vmem %s558, %s679
                $region67: #{cmg_unpooling.1} parent=61 // loop_footer
                  %s643 = sadd.s32 %s641, 1
                $region68: #{cmg_unpooling.1} parent=61 // loop_footer_branch
                  %640 = sbr.rel target = $region64
                $region69: #{cmg_unpooling.1} parent=61 // loop_exit
                  _
                %s682 = sdiv.u32.pop %s553, 13
                %s683 = srem.u32.pop %s553, 13
                %s684 = smul.u32 %s682, 13
                %s685 = smul.u32 8, %s684
                %s686 = scalar_lea.vmem %s546, %s685 [#allocation2]
                %s687 = smul.u32 8, %s684
                %s688 = scalar_lea.vmem %s558, %s687
                // While loop
                $region70: #{cmg_unpooling.1} parent=61 // loop_pre_header
                  _
                $region71: #{cmg_unpooling.1} parent=61 // loop_header
                  %s690 = sphi 0, %s692
                  %p691 = scmp.ge.s32.totalorder %s690, %s683
                  %s695 = sphi 0, %s702
                  %s696 = sphi %s686, %s705
                  %s697 = sphi %s688, %s706
                $region72: #{cmg_unpooling.1} parent=61 // loop_header_branch
                  %694 = sbr.rel (%p691) target = $region76
                $region73: #{cmg_unpooling.1} parent=61 // loop_body
                  %v698 = vld [vmem:[%s696] sm:$0xff]
                  %699 = vst [vmem:[%s697] sm:$0xff] %v698
                  %s700 = sadd.s32 1, %s695
                  %p701 = scmp.ge.s32.totalorder %s700, %s683
                  %s702 = scalar_select %p701, 0, %s700
                  %s703 = smul.u32 %s702, 8
                  %s704 = smul.u32 %s702, 8
                  %s705 = scalar_lea.vmem %s686, %s703 [#allocation2]
                  %s706 = scalar_lea.vmem %s688, %s704
                $region74: #{cmg_unpooling.1} parent=61 // loop_footer
                  %s692 = sadd.s32 %s690, 1
                $region75: #{cmg_unpooling.1} parent=61 // loop_footer_branch
                  %689 = sbr.rel target = $region71
                $region76: #{cmg_unpooling.1} parent=61 // loop_exit
                  _
              $region62: #{cmg_unpooling.1} parent=39 // pred_fallthru
                _
              // Predicated region
              $region77: #{cmg_unpooling.1} parent=39 // pred_check
                _
              $region78: #{cmg_unpooling.1} parent=39 // pred_check_branch
                %708 = sbr.rel target = $region80
              $region79: #{cmg_unpooling.1} parent=39 // pred_region
                _
              $region80: #{cmg_unpooling.1} parent=39 // pred_fallthru
                _
            $region40: #{cmg_unpooling.1} parent=35 // pred_fallthru
              _
            // Predicated region
            $region41: #{cmg_unpooling.1} parent=35 // pred_check
              _
            $region42: #{cmg_unpooling.1} parent=35 // pred_check_branch
              %565 = sbr.rel target = $region44
            $region43: #{cmg_unpooling.1} parent=35 // pred_region
              %s567 = sdiv.u32.pop %s553, 13
              %s568 = srem.u32.pop %s553, 13
              // While loop
              $region45: #{cmg_unpooling.1} parent=43 // loop_pre_header
                _
              $region46: #{cmg_unpooling.1} parent=43 // loop_header
                %s570 = sphi 0, %s572
                %p571 = scmp.ge.s32.totalorder %s570, %s567
                %s575 = sphi 0, %s606
                %s576 = sphi %s546, %s609
                %s577 = sphi %s558, %s610
              $region47: #{cmg_unpooling.1} parent=43 // loop_header_branch
                %574 = sbr.rel (%p571) target = $region51
              $region48: #{cmg_unpooling.1} parent=43 // loop_body
                %v578 = vld [vmem:[%s576] sm:$0xff]
                %579 = vst [vmem:[%s577] sm:$0xff] %v578
                %v580 = vld [vmem:[%s576 + $0x8] sm:$0xff]
                %581 = vst [vmem:[%s577 + $0x8] sm:$0xff] %v580
                %v582 = vld [vmem:[%s576 + $0x10] sm:$0xff]
                %583 = vst [vmem:[%s577 + $0x10] sm:$0xff] %v582
                %v584 = vld [vmem:[%s576 + $0x18] sm:$0xff]
                %585 = vst [vmem:[%s577 + $0x18] sm:$0xff] %v584
                %v586 = vld [vmem:[%s576 + $0x20] sm:$0xff]
                %587 = vst [vmem:[%s577 + $0x20] sm:$0xff] %v586
                %v588 = vld [vmem:[%s576 + $0x28] sm:$0xff]
                %589 = vst [vmem:[%s577 + $0x28] sm:$0xff] %v588
                %v590 = vld [vmem:[%s576 + $0x30] sm:$0xff]
                %591 = vst [vmem:[%s577 + $0x30] sm:$0xff] %v590
                %v592 = vld [vmem:[%s576 + $0x38] sm:$0xff]
                %593 = vst [vmem:[%s577 + $0x38] sm:$0xff] %v592
                %v594 = vld [vmem:[%s576 + $0x40] sm:$0xff]
                %595 = vst [vmem:[%s577 + $0x40] sm:$0xff] %v594
                %v596 = vld [vmem:[%s576 + $0x48] sm:$0xff]
                %597 = vst [vmem:[%s577 + $0x48] sm:$0xff] %v596
                %v598 = vld [vmem:[%s576 + $0x50] sm:$0xff]
                %599 = vst [vmem:[%s577 + $0x50] sm:$0xff] %v598
                %v600 = vld [vmem:[%s576 + $0x58] sm:$0xff]
                %601 = vst [vmem:[%s577 + $0x58] sm:$0xff] %v600
                %v602 = vld [vmem:[%s576 + $0x60] sm:$0xff]
                %603 = vst [vmem:[%s577 + $0x60] sm:$0xff] %v602
                %s604 = sadd.s32 1, %s575
                %p605 = scmp.ge.s32.totalorder %s604, %s567
                %s606 = scalar_select %p605, 0, %s604
                %s607 = smul.u32 %s606, 104
                %s608 = smul.u32 %s606, 104
                %s609 = scalar_lea.vmem %s546, %s607 [#allocation2]
                %s610 = scalar_lea.vmem %s558, %s608
              $region49: #{cmg_unpooling.1} parent=43 // loop_footer
                %s572 = sadd.s32 %s570, 1
              $region50: #{cmg_unpooling.1} parent=43 // loop_footer_branch
                %569 = sbr.rel target = $region46
              $region51: #{cmg_unpooling.1} parent=43 // loop_exit
                _
              %s611 = sdiv.u32.pop %s553, 13
              %s612 = srem.u32.pop %s553, 13
              %s613 = smul.u32 %s611, 13
              %s614 = smul.u32 8, %s613
              %s615 = scalar_lea.vmem %s546, %s614 [#allocation2]
              %s616 = smul.u32 8, %s613
              %s617 = scalar_lea.vmem %s558, %s616
              // While loop
              $region52: #{cmg_unpooling.1} parent=43 // loop_pre_header
                _
              $region53: #{cmg_unpooling.1} parent=43 // loop_header
                %s619 = sphi 0, %s621
                %p620 = scmp.ge.s32.totalorder %s619, %s612
                %s624 = sphi 0, %s631
                %s625 = sphi %s615, %s634
                %s626 = sphi %s617, %s635
              $region54: #{cmg_unpooling.1} parent=43 // loop_header_branch
                %623 = sbr.rel (%p620) target = $region58
              $region55: #{cmg_unpooling.1} parent=43 // loop_body
                %v627 = vld [vmem:[%s625] sm:$0xff]
                %628 = vst [vmem:[%s626] sm:$0xff] %v627
                %s629 = sadd.s32 1, %s624
                %p630 = scmp.ge.s32.totalorder %s629, %s612
                %s631 = scalar_select %p630, 0, %s629
                %s632 = smul.u32 %s631, 8
                %s633 = smul.u32 %s631, 8
                %s634 = scalar_lea.vmem %s615, %s632 [#allocation2]
                %s635 = scalar_lea.vmem %s617, %s633
              $region56: #{cmg_unpooling.1} parent=43 // loop_footer
                %s621 = sadd.s32 %s619, 1
              $region57: #{cmg_unpooling.1} parent=43 // loop_footer_branch
                %618 = sbr.rel target = $region53
              $region58: #{cmg_unpooling.1} parent=43 // loop_exit
                _
            $region44: #{cmg_unpooling.1} parent=35 // pred_fallthru
              _
          $region36: #{cmg_unpooling.1} parent=31 // pred_fallthru
            _
          %709 = vnop
        $region32: #{cmg_unpooling.1} parent=27 // pred_fallthru
          _
      $region28: #{cmg_unpooling.1} parent=5 // pred_fallthru
        _
      %p710 = scmp.le.s32.totalorder 2, %s8
      // Predicated region
      $region81: #{cmg_unpooling.1} parent=5 // pred_check
        %p711 = pneg %p710
      $region82: #{cmg_unpooling.1} parent=5 // pred_check_branch
        %713 = sbr.rel (%p711) target = $region84
      $region83: #{cmg_unpooling.1} parent=5 // pred_region
        %s714 = ssub.s32 %s8, 2
        // Predicated region
        $region85: #{cmg_unpooling.1} parent=83 // pred_check
          %p715 = pneg %p103
        $region86: #{cmg_unpooling.1} parent=83 // pred_check_branch
          %717 = sbr.rel (%p715) target = $region88
        $region87: #{cmg_unpooling.1} parent=83 // pred_region
          %s718 = sand.u32 %s88, 1
          %s719 = sand.u32 %s88, 1
          %s720 = smul.addr %s719, 104
          %s721 = scalar_lea.vmem [#allocation2], %s720
        $region88: #{cmg_unpooling.1} parent=83 // pred_fallthru
          _
      $region84: #{cmg_unpooling.1} parent=5 // pred_fallthru
        _
    $region6: #{cmg_unpooling.1} parent=1 // loop_footer
      %s12 = sadd.s32 1, %s8
    $region7: #{cmg_unpooling.1} parent=1 // loop_footer_branch
      %7 = sbr.rel target = $region3
    $region8: #{cmg_unpooling.1} parent=1 // loop_exit
      _

</llo_original>
